<compile_context>
chip_gen: v6e
topology: v6e:2x2x1
jax: 0.10.0
libtpu: 0.0.40
codegen_flags: <defaults>
</compile_context>

<pallas_src>
import functools
import math

import jax
import jax.numpy as jnp
from jax.experimental import pallas as pl
from jax.experimental.pallas import tpu as pltpu


def gc_block_kernel(x_ref, w_ref, adj_ref, bn_ref, o_ref, *, batch):
    """Fused GC_Block forward (eval mode), single grid step.

    x_ref   : (Np, B*F)      f32   activations, batch folded into lanes
    w_ref   : (2, B*F, B*F)  bf16  [kron(I_B, W1), kron(I_B, W2)]
    adj_ref : (2, Np, Np)    bf16  zero-padded per-batch adjacencies
    bn_ref  : (4, Np, F)     f32   [scale1, shift1', scale2, shift2']
                                   (GC bias folded into the shifts; padded
                                    rows are zero)
    o_ref   : (Np, B*F)      f32
    """
    x = x_ref[...]                                            # (Np, B*F) f32

    def gc_bn_relu(inp, li):
        # support = inp @ blockdiag(W)   (bf16 operands, f32 MXU accumulation)
        s = jnp.dot(inp.astype(jnp.bfloat16), w_ref[li],
                    preferred_element_type=jnp.float32)       # (Np, B*F)
        # y = adj @ support  — one true-work matmul across all batches (lanes)
        y = jnp.dot(adj_ref[li], s.astype(jnp.bfloat16),
                    preferred_element_type=jnp.float32)       # (Np, B*F)
        # eval-mode BatchNorm folded to scale/shift; broadcast along lanes
        scale = jnp.tile(bn_ref[2 * li], (1, batch))          # (Np, B*F)
        shift = jnp.tile(bn_ref[2 * li + 1], (1, batch))
        return jnp.maximum(y * scale + shift, 0.0)

    y = gc_bn_relu(x, 0)
    y = gc_bn_relu(y, 1)
    o_ref[...] = (y + x).astype(o_ref.dtype)                  # residual


def pack_gc_block_params(params, batch, node_n, in_features, eps=1e-5):
    """One-time host packing: fold eval-BN + GC bias, pad node dim, kron W."""
    N, F, B = node_n, in_features, batch
    Np = ((N + 7) // 8) * 8                   # sublane-align node dim (57->64)

    def fold(gamma, beta, mean, var, bias):
        inv = gamma / jnp.sqrt(var + eps)
        scale = inv.reshape(N, F)
        shift = (beta - mean * inv).reshape(N, F)
        shift = shift + bias[None, :] * scale        # fold GC bias into shift
        pad = ((0, Np - N), (0, 0))                  # padded rows -> exact 0
        return jnp.pad(scale, pad), jnp.pad(shift, pad)

    s1, sh1 = fold(params["bn1_gamma"], params["bn1_beta"],
                   params["bn1_mean"], params["bn1_var"], params["gc1_bias"])
    s2, sh2 = fold(params["bn2_gamma"], params["bn2_beta"],
                   params["bn2_mean"], params["bn2_var"], params["gc2_bias"])
    bn_pk = jnp.stack([s1, sh1, s2, sh2], axis=0)              # (4, Np, F) f32

    # Zero-padded per-batch adjacencies (padded rows/cols are zero -> no leak).
    pad_a = ((0, Np - N), (0, Np - N))
    adj_pk = jnp.stack([jnp.pad(params["gc1_adj"], pad_a),
                        jnp.pad(params["gc2_adj"], pad_a)],
                       axis=0).astype(jnp.bfloat16)            # (2, Np, Np)

    # Block-diagonal weights so x(N,B*F) @ W is one 2-D matmul (tiny at B=2).
    eye = jnp.eye(B, dtype=jnp.float32)
    w_pk = jnp.stack([jnp.kron(eye, params["gc1_weight"]),
                      jnp.kron(eye, params["gc2_weight"])],
                     axis=0).astype(jnp.bfloat16)              # (2, B*F, B*F)
    return {"w": w_pk, "adj": adj_pk, "bn": bn_pk}


@jax.jit
def gc_block_forward(x, packed):
    """x: (B, N, F) float32. packed: output of pack_gc_block_params."""
    B, N, F = x.shape
    Np = packed["adj"].shape[-1]
    BF = B * F

    # Fold batch into lanes: x2[n, b*F + f] = x[b, n, f]; pad node dim.
    x2 = jnp.transpose(x, (1, 0, 2)).reshape(N, BF)
    x2 = jnp.pad(x2, ((0, Np - N), (0, 0)))

    out2 = pl.pallas_call(
        functools.partial(gc_block_kernel, batch=B),
        out_shape=jax.ShapeDtypeStruct((Np, BF), x.dtype),
        grid=(1,),                                   # whole batch in one step
        in_specs=[
            pl.BlockSpec((Np, BF), lambda i: (0, 0)),         # activations
            pl.BlockSpec((2, BF, BF), lambda i: (0, 0, 0)),   # block-diag W
            pl.BlockSpec((2, Np, Np), lambda i: (0, 0, 0)),   # adjacencies
            pl.BlockSpec((4, Np, F), lambda i: (0, 0, 0)),    # BN scale/shift
        ],
        out_specs=pl.BlockSpec((Np, BF), lambda i: (0, 0)),
        compiler_params=pltpu.CompilerParams(
            dimension_semantics=("arbitrary",)),
    )(x2, packed["w"], packed["adj"], packed["bn"])

    # Slice off padded nodes and unfold batch from lanes.
    return jnp.transpose(out2[:N].reshape(N, B, F), (1, 0, 2))


def init_params(key, in_features, node_n):
    """Deterministic init mirroring GraphConvolution.reset_parameters and
    BatchNorm1d buffers (randomized gamma/beta/stats to exercise the math)."""
    F, N = in_features, node_n
    stdv = 1.0 / math.sqrt(F)
    keys = jax.random.split(key, 14)
    u = lambda k, shape: jax.random.uniform(k, shape, jnp.float32, -stdv, stdv)
    params = {
        "gc1_weight": u(keys[0], (F, F)),
        "gc1_adj":    u(keys[1], (N, N)),
        "gc1_bias":   u(keys[2], (F,)),
        "gc2_weight": u(keys[3], (F, F)),
        "gc2_adj":    u(keys[4], (N, N)),
        "gc2_bias":   u(keys[5], (F,)),
        "bn1_gamma":  1.0 + 0.1 * jax.random.normal(keys[6], (N * F,), jnp.float32),
        "bn1_beta":   0.1 * jax.random.normal(keys[7], (N * F,), jnp.float32),
        "bn1_mean":   0.1 * jax.random.normal(keys[8], (N * F,), jnp.float32),
        "bn1_var":    jnp.abs(1.0 + 0.1 * jax.random.normal(keys[9], (N * F,), jnp.float32)),
        "bn2_gamma":  1.0 + 0.1 * jax.random.normal(keys[10], (N * F,), jnp.float32),
        "bn2_beta":   0.1 * jax.random.normal(keys[11], (N * F,), jnp.float32),
        "bn2_mean":   0.1 * jax.random.normal(keys[12], (N * F,), jnp.float32),
        "bn2_var":    jnp.abs(1.0 + 0.1 * jax.random.normal(keys[13], (N * F,), jnp.float32)),
    }
    return params


def gc_block_reference(x, params, matmul_dtype=jnp.float32):
    """Plain-JAX reference.  With matmul_dtype=bfloat16 it mimics the kernel's
    bf16-operand / f32-accumulation MXU numerics; with float32 it is the exact
    eval-mode math of the PyTorch module."""
    B, N, F = x.shape
    eps = 1e-5

    def gc(inp, W, adj, bias):
        support = jnp.einsum("bnf,fg->bng",
                             inp.astype(matmul_dtype), W.astype(matmul_dtype),
                             preferred_element_type=jnp.float32)
        out = jnp.einsum("nm,bmg->bng",
                         adj.astype(matmul_dtype), support.astype(matmul_dtype),
                         preferred_element_type=jnp.float32)
        return out + bias

    def bn(y, g, bt, rm, rv):
        yf = y.reshape(B, -1)
        yf = (yf - rm) / jnp.sqrt(rv + eps) * g + bt
        return yf.reshape(B, N, F)

    y = gc(x, params["gc1_weight"], params["gc1_adj"], params["gc1_bias"])
    y = jax.nn.relu(bn(y, params["bn1_gamma"], params["bn1_beta"],
                       params["bn1_mean"], params["bn1_var"]))
    y = gc(y, params["gc2_weight"], params["gc2_adj"], params["gc2_bias"])
    y = jax.nn.relu(bn(y, params["bn2_gamma"], params["bn2_beta"],
                       params["bn2_mean"], params["bn2_var"]))
    return y + x


if __name__ == "__main__":
    B, N, F = 2, 57, 32   # batch, node_n, in_features
    key = jax.random.PRNGKey(0)
    kx, kp = jax.random.split(key)
    x = jax.random.normal(kx, (B, N, F), jnp.float32)
    params = init_params(kp, F, N)

    packed = pack_gc_block_params(params, B, N, F)   # one-time host packing
    out = gc_block_forward(x, packed)
    out = jax.block_until_ready(out)
    assert out.shape == (B, N, F)

    # Structural check: reference with the same bf16-operand / f32-accumulation
    # matmul numerics as the kernel -> tight tolerance.
    ref_bf16 = gc_block_reference(x, params, matmul_dtype=jnp.bfloat16)
    assert jnp.allclose(out, ref_bf16, atol=3e-3, rtol=3e-3), \
        "mismatch vs bf16-matmul reference"

    # Semantic check: exact fp32 eval-mode GC_Block math; tolerance widened to
    # account for the bf16 MXU operands used inside the kernel.
    ref_f32 = gc_block_reference(x, params, matmul_dtype=jnp.float32)
    assert jnp.allclose(out, ref_f32, atol=5e-2, rtol=5e-2), \
        "mismatch vs fp32 reference"

    print("KERNEL_OK")
</pallas_src>

<mosaic_0001>
module attributes {stable_mosaic.version = 11 : i64} {
  func.func @gc_block_kernel(%arg0: i32, %arg1: memref<64x64xf32, #tpu.memory_space<vmem>>, %arg2: memref<2x64x64xbf16, #tpu.memory_space<vmem>>, %arg3: memref<2x64x64xbf16, #tpu.memory_space<vmem>>, %arg4: memref<4x64x32xf32, #tpu.memory_space<vmem>>, %arg5: memref<64x64xf32, #tpu.memory_space<vmem>>) attributes {dimension_semantics = [#tpu.dimension_semantics<arbitrary>], iteration_bounds = array<i64: 1>, scalar_prefetch = 0 : i64, scratch_operands = 0 : i64, tpu.core_type = #tpu.core_type<tc>, window_params = [{pipeline_mode = #tpu.pipeline_mode<synchronous>, transform_indices = @transform_0, window_bounds = array<i64: 64, 64>}, {pipeline_mode = #tpu.pipeline_mode<synchronous>, transform_indices = @transform_1, window_bounds = array<i64: 2, 64, 64>}, {pipeline_mode = #tpu.pipeline_mode<synchronous>, transform_indices = @transform_2, window_bounds = array<i64: 2, 64, 64>}, {pipeline_mode = #tpu.pipeline_mode<synchronous>, transform_indices = @transform_3, window_bounds = array<i64: 4, 64, 32>}, {pipeline_mode = #tpu.pipeline_mode<synchronous>, transform_indices = @transform_4, window_bounds = array<i64: 64, 64>}]} {
    %c0 = arith.constant 0 : index
    %c0_0 = arith.constant 0 : index
    %0 = vector.load %arg1[%c0, %c0_0] : memref<64x64xf32, #tpu.memory_space<vmem>>, vector<64x64xf32>
    %1 = arith.truncf %0 : vector<64x64xf32> to vector<64x64xbf16>
    %c0_1 = arith.constant 0 : index
    %c0_2 = arith.constant 0 : index
    %c0_3 = arith.constant 0 : index
    %2 = vector.load %arg2[%c0_1, %c0_2, %c0_3] : memref<2x64x64xbf16, #tpu.memory_space<vmem>>, vector<1x64x64xbf16>
    %3 = vector.shape_cast %2 : vector<1x64x64xbf16> to vector<64x64xbf16>
    %cst = arith.constant dense<0.000000e+00> : vector<64x64xf32>
    %4 = tpu.matmul %1, %3, %cst {dimension_numbers = #tpu.dot_dimension_numbers<[1], [0], [0], [1], [0, 0, 1, 1], [], []>} : vector<64x64xbf16>, vector<64x64xbf16>, vector<64x64xf32> -> vector<64x64xf32>
    %c0_4 = arith.constant 0 : index
    %c0_5 = arith.constant 0 : index
    %c0_6 = arith.constant 0 : index
    %5 = vector.load %arg3[%c0_4, %c0_5, %c0_6] : memref<2x64x64xbf16, #tpu.memory_space<vmem>>, vector<1x64x64xbf16>
    %6 = vector.shape_cast %5 : vector<1x64x64xbf16> to vector<64x64xbf16>
    %7 = arith.truncf %4 : vector<64x64xf32> to vector<64x64xbf16>
    %cst_7 = arith.constant dense<0.000000e+00> : vector<64x64xf32>
    %8 = tpu.matmul %6, %7, %cst_7 {dimension_numbers = #tpu.dot_dimension_numbers<[1], [0], [0], [1], [0, 0, 1, 1], [], []>} : vector<64x64xbf16>, vector<64x64xbf16>, vector<64x64xf32> -> vector<64x64xf32>
    %c0_8 = arith.constant 0 : index
    %c0_9 = arith.constant 0 : index
    %c0_10 = arith.constant 0 : index
    %9 = vector.load %arg4[%c0_8, %c0_9, %c0_10] : memref<4x64x32xf32, #tpu.memory_space<vmem>>, vector<1x64x32xf32>
    %10 = vector.shape_cast %9 : vector<1x64x32xf32> to vector<64x32xf32>
    %11 = tpu.concatenate %10, %10 in 1 : vector<64x32xf32>, vector<64x32xf32> -> vector<64x64xf32>
    %c1 = arith.constant 1 : index
    %c0_11 = arith.constant 0 : index
    %c0_12 = arith.constant 0 : index
    %12 = vector.load %arg4[%c1, %c0_11, %c0_12] : memref<4x64x32xf32, #tpu.memory_space<vmem>>, vector<1x64x32xf32>
    %13 = vector.shape_cast %12 : vector<1x64x32xf32> to vector<64x32xf32>
    %14 = tpu.concatenate %13, %13 in 1 : vector<64x32xf32>, vector<64x32xf32> -> vector<64x64xf32>
    %15 = arith.mulf %8, %11 : vector<64x64xf32>
    %16 = arith.addf %15, %14 : vector<64x64xf32>
    %cst_13 = arith.constant 0.000000e+00 : f32
    %17 = vector.broadcast %cst_13 : f32 to vector<64x64xf32>
    %18 = arith.maximumf %16, %17 : vector<64x64xf32>
    %19 = arith.truncf %18 : vector<64x64xf32> to vector<64x64xbf16>
    %c1_14 = arith.constant 1 : index
    %c0_15 = arith.constant 0 : index
    %c0_16 = arith.constant 0 : index
    %20 = vector.load %arg2[%c1_14, %c0_15, %c0_16] : memref<2x64x64xbf16, #tpu.memory_space<vmem>>, vector<1x64x64xbf16>
    %21 = vector.shape_cast %20 : vector<1x64x64xbf16> to vector<64x64xbf16>
    %cst_17 = arith.constant dense<0.000000e+00> : vector<64x64xf32>
    %22 = tpu.matmul %19, %21, %cst_17 {dimension_numbers = #tpu.dot_dimension_numbers<[1], [0], [0], [1], [0, 0, 1, 1], [], []>} : vector<64x64xbf16>, vector<64x64xbf16>, vector<64x64xf32> -> vector<64x64xf32>
    %c1_18 = arith.constant 1 : index
    %c0_19 = arith.constant 0 : index
    %c0_20 = arith.constant 0 : index
    %23 = vector.load %arg3[%c1_18, %c0_19, %c0_20] : memref<2x64x64xbf16, #tpu.memory_space<vmem>>, vector<1x64x64xbf16>
    %24 = vector.shape_cast %23 : vector<1x64x64xbf16> to vector<64x64xbf16>
    %25 = arith.truncf %22 : vector<64x64xf32> to vector<64x64xbf16>
    %cst_21 = arith.constant dense<0.000000e+00> : vector<64x64xf32>
    %26 = tpu.matmul %24, %25, %cst_21 {dimension_numbers = #tpu.dot_dimension_numbers<[1], [0], [0], [1], [0, 0, 1, 1], [], []>} : vector<64x64xbf16>, vector<64x64xbf16>, vector<64x64xf32> -> vector<64x64xf32>
    %c2 = arith.constant 2 : index
    %c0_22 = arith.constant 0 : index
    %c0_23 = arith.constant 0 : index
    %27 = vector.load %arg4[%c2, %c0_22, %c0_23] : memref<4x64x32xf32, #tpu.memory_space<vmem>>, vector<1x64x32xf32>
    %28 = vector.shape_cast %27 : vector<1x64x32xf32> to vector<64x32xf32>
    %29 = tpu.concatenate %28, %28 in 1 : vector<64x32xf32>, vector<64x32xf32> -> vector<64x64xf32>
    %c3 = arith.constant 3 : index
    %c0_24 = arith.constant 0 : index
    %c0_25 = arith.constant 0 : index
    %30 = vector.load %arg4[%c3, %c0_24, %c0_25] : memref<4x64x32xf32, #tpu.memory_space<vmem>>, vector<1x64x32xf32>
    %31 = vector.shape_cast %30 : vector<1x64x32xf32> to vector<64x32xf32>
    %32 = tpu.concatenate %31, %31 in 1 : vector<64x32xf32>, vector<64x32xf32> -> vector<64x64xf32>
    %33 = arith.mulf %26, %29 : vector<64x64xf32>
    %34 = arith.addf %33, %32 : vector<64x64xf32>
    %cst_26 = arith.constant 0.000000e+00 : f32
    %35 = vector.broadcast %cst_26 : f32 to vector<64x64xf32>
    %36 = arith.maximumf %34, %35 : vector<64x64xf32>
    %37 = arith.addf %36, %0 : vector<64x64xf32>
    %c0_27 = arith.constant 0 : index
    %c0_28 = arith.constant 0 : index
    %38 = vector.load %arg5[%c0_27, %c0_28] : memref<64x64xf32, #tpu.memory_space<vmem>>, vector<64x64xf32>
    tpu.vector_store %arg5[%c0_27, %c0_28], %37 {strides = array<i32>} : memref<64x64xf32, #tpu.memory_space<vmem>>, vector<64x64xf32>,
    return
  }
  func.func @transform_0(%arg0: i32) -> (i32, i32) {
    %c0_i32 = arith.constant 0 : i32
    %c0_i32_0 = arith.constant 0 : i32
    %c0_i32_1 = arith.constant 0 : i32
    return %c0_i32, %c0_i32_0 : i32, i32
  }
  func.func @transform_1(%arg0: i32) -> (i32, i32, i32) {
    %c0_i32 = arith.constant 0 : i32
    %c0_i32_0 = arith.constant 0 : i32
    %c0_i32_1 = arith.constant 0 : i32
    %c0_i32_2 = arith.constant 0 : i32
    return %c0_i32, %c0_i32_0, %c0_i32_1 : i32, i32, i32
  }
  func.func @transform_2(%arg0: i32) -> (i32, i32, i32) {
    %c0_i32 = arith.constant 0 : i32
    %c0_i32_0 = arith.constant 0 : i32
    %c0_i32_1 = arith.constant 0 : i32
    %c0_i32_2 = arith.constant 0 : i32
    return %c0_i32, %c0_i32_0, %c0_i32_1 : i32, i32, i32
  }
  func.func @transform_3(%arg0: i32) -> (i32, i32, i32) {
    %c0_i32 = arith.constant 0 : i32
    %c0_i32_0 = arith.constant 0 : i32
    %c0_i32_1 = arith.constant 0 : i32
    %c0_i32_2 = arith.constant 0 : i32
    return %c0_i32, %c0_i32_0, %c0_i32_1 : i32, i32, i32
  }
  func.func @transform_4(%arg0: i32) -> (i32, i32) {
    %c0_i32 = arith.constant 0 : i32
    %c0_i32_0 = arith.constant 0 : i32
    %c0_i32_1 = arith.constant 0 : i32
    return %c0_i32, %c0_i32_0 : i32, i32
  }
}

</mosaic_0001>

<llo_original>
// kernel: gc_block_forward.1
$region0: #{gc_block_forward.1}
  #allocation0 [shape = 'u32[]', space=smem, size = 0x4, offset = 0x4, fixed_abs, tag = 'smem constant byte address 0x4 - core index']
  #allocation1 [shape = 'u32[144,128]{1,0:T(1,128)}', space=vmem, size = 0x12000, scoped, tag = 'internal scratch']
  %s0 = inlined_call_operand.vmem [shape: f32[64,64], index: 0, kind: input, shape index: {}]
  %s1 = inlined_call_operand.vmem [shape: bf16[2,64,64], index: 1, kind: input, shape index: {}]
  %s2 = inlined_call_operand.vmem [shape: bf16[2,64,64], index: 2, kind: input, shape index: {}]
  %s3 = inlined_call_operand.vmem [shape: f32[4,64,32], index: 3, kind: input, shape index: {}]
  %s4 = inlined_call_operand.vmem [shape: f32[64,64], index: 4, kind: output, shape index: {}]
  %s5 = sld [smem:[#allocation0]]
  $region26: #{gc_block_forward.1} parent=0
    _
  %s7 = ssub.s32 1, %s5
  %s8 = scalar_select 0, %s7, %s5
  // Predicated region
  $region2: #{gc_block_forward.1} parent=0 // pred_check
    _
  $region3: #{gc_block_forward.1} parent=0 // pred_check_branch
    %10 = sbr.rel (0) target = $region5
  $region4: #{gc_block_forward.1} parent=0 // pred_region
    _
  $region5: #{gc_block_forward.1} parent=0 // pred_fallthru
    _
  // Predicated region
  $region6: #{gc_block_forward.1} parent=0 // pred_check
    _
  $region7: #{gc_block_forward.1} parent=0 // pred_check_branch
    %12 = sbr.rel (0) target = $region9
  $region8: #{gc_block_forward.1} parent=0 // pred_region
    _
  $region9: #{gc_block_forward.1} parent=0 // pred_fallthru
    _
  // Predicated region
  $region10: #{gc_block_forward.1} parent=0 // pred_check
    _
  $region11: #{gc_block_forward.1} parent=0 // pred_check_branch
    %14 = sbr.rel (0) target = $region13
  $region12: #{gc_block_forward.1} parent=0 // pred_region
    _
  $region13: #{gc_block_forward.1} parent=0 // pred_fallthru
    _
  // Predicated region
  $region14: #{gc_block_forward.1} parent=0 // pred_check
    _
  $region15: #{gc_block_forward.1} parent=0 // pred_check_branch
    %16 = sbr.rel (0) target = $region17
  $region16: #{gc_block_forward.1} parent=0 // pred_region
    _
  $region17: #{gc_block_forward.1} parent=0 // pred_fallthru
    _
  %v18 = vld [vmem:[%s0] sm:$0xff]
  %v19 = vld [vmem:[%s0 + $0x8] sm:$0xff]
  %v20 = vld [vmem:[%s0 + $0x10] sm:$0xff]
  %v21 = vld [vmem:[%s0 + $0x18] sm:$0xff]
  %v22 = vld [vmem:[%s0 + $0x20] sm:$0xff]
  %v23 = vld [vmem:[%s0 + $0x28] sm:$0xff]
  %v24 = vld [vmem:[%s0 + $0x30] sm:$0xff]
  %v25 = vld [vmem:[%s0 + $0x38] sm:$0xff]
  %v26 = vpack.c.bf16 %v19, %v18
  %v27 = vpack.c.bf16 %v21, %v20
  %v28 = vpack.c.bf16 %v23, %v22
  %v29 = vpack.c.bf16 %v25, %v24
  %v30 = vld [vmem:[%s1] sm:$0xf]
  %v31 = vld [vmem:[%s1 + $0x4] sm:$0xf]
  %v32 = vld [vmem:[%s1 + $0x8] sm:$0xf]
  %v33 = vld [vmem:[%s1 + $0xc] sm:$0xf]
  %v34 = vld [vmem:[%s1 + $0x10] sm:$0xf]
  %v35 = vld [vmem:[%s1 + $0x14] sm:$0xf]
  %v36 = vld [vmem:[%s1 + $0x18] sm:$0xf]
  %v37 = vld [vmem:[%s1 + $0x1c] sm:$0xf]
  %v46 = vunpack.c.l.b16 %v30
  %v47 = vunpack.c.l.b16 %v31
  %v48 = vunpack.c.l.b16 %v32
  %v49 = vunpack.c.l.b16 %v33
  %v50 = vunpack.c.l.b16 %v34
  %v51 = vunpack.c.l.b16 %v35
  %v52 = vunpack.c.l.b16 %v36
  %v53 = vunpack.c.l.b16 %v37
  %v54 = vpack.c.b16 %v47, %v46
  %v55 = vpack.c.b16 %v49, %v48
  %v56 = vpack.c.b16 %v51, %v50
  %v57 = vpack.c.b16 %v53, %v52
  %vm62 = vcmask 523264
  %v64 = vsel %vm62, %v26, 0
  %v67 = vsel %vm62, %v27, 0
  %v70 = vsel %vm62, %v28, 0
  %v73 = vsel %vm62, %v29, 0
  %75 = vmatprep.subr.bf16.mxu0 0
  %76 = vmatpush1.bf16.msra.mxu0 0
  %77 = vmatprep.subr.bf16.mxu0 0
  %78 = vmatpush1.bf16.msra.mxu0 0
  %79 = vmatprep.subr.bf16.mxu0 0
  %80 = vmatpush1.bf16.msra.mxu0 0
  %81 = vmatprep.subr.bf16.mxu0 0
  %82 = vmatpush1.bf16.msra.mxu0 0
  %83 = vmatprep.subr.bf16.mxu0 0
  %84 = vmatpush1.bf16.msra.mxu0 %v57
  %85 = vmatprep.subr.bf16.mxu0 0
  %86 = vmatpush1.bf16.msra.mxu0 %v56
  %87 = vmatprep.subr.bf16.mxu0 0
  %88 = vmatpush1.bf16.msra.mxu0 %v55
  %89 = vmatprep.subr.bf16.mxu0 0
  %90 = vmatpush1.bf16.msra.mxu0 %v54
  %91 = vmatprep.subr.bf16.mxu0 0
  %92 = vmatpush2.bf16.msra.mxu0 0
  %93 = vmatprep.subr.bf16.mxu0 0
  %94 = vmatpush2.bf16.msra.mxu0 0
  %95 = vmatprep.subr.bf16.mxu0 0
  %96 = vmatpush2.bf16.msra.mxu0 0
  %97 = vmatprep.subr.bf16.mxu0 0
  %98 = vmatpush2.bf16.msra.mxu0 0
  %99 = vmatprep.subr.bf16.mxu0 0
  %100 = vmatpush2.bf16.msra.mxu0 0
  %101 = vmatprep.subr.bf16.mxu0 0
  %102 = vmatpush2.bf16.msra.mxu0 0
  %103 = vmatprep.subr.bf16.mxu0 0
  %104 = vmatpush2.bf16.msra.mxu0 0
  %105 = vmatprep.subr.bf16.mxu0 0
  %106 = vmatpush2.bf16.msra.mxu0 0
  %107 = vmatprep.mubr.bf16.mxu0 0
  %108 = vmatmul.mubr.bf16.gmra.mxu0 %v64
  %v109 = vpop.f32.mrf.mxu0
  %v110 = vadd.f32 0.0, %v109
  %v111 = vpop.f32.mrf.mxu0
  %v112 = vpop.f32.mrf.mxu0
  %v113 = vadd.f32 0.0, %v112
  %v114 = vpop.f32.mrf.mxu0
  %115 = vmatprep.mubr.bf16.mxu0 0
  %116 = vmatmul.mubr.bf16.gmra.mxu0 %v67
  %v117 = vpop.f32.mrf.mxu0
  %v118 = vadd.f32 0.0, %v117
  %v119 = vpop.f32.mrf.mxu0
  %v120 = vpop.f32.mrf.mxu0
  %v121 = vadd.f32 0.0, %v120
  %v122 = vpop.f32.mrf.mxu0
  %123 = vmatprep.mubr.bf16.mxu0 0
  %124 = vmatmul.mubr.bf16.gmra.mxu0 %v70
  %v125 = vpop.f32.mrf.mxu0
  %v126 = vadd.f32 0.0, %v125
  %v127 = vpop.f32.mrf.mxu0
  %v128 = vpop.f32.mrf.mxu0
  %v129 = vadd.f32 0.0, %v128
  %v130 = vpop.f32.mrf.mxu0
  %131 = vmatprep.mubr.bf16.mxu0 0
  %132 = vmatmul.mubr.bf16.gmra.mxu0 %v73
  %v133 = vpop.f32.mrf.mxu0
  %v134 = vadd.f32 0.0, %v133
  %v135 = vpop.f32.mrf.mxu0
  %v136 = vpop.f32.mrf.mxu0
  %v137 = vadd.f32 0.0, %v136
  %v138 = vpop.f32.mrf.mxu0
  %139 = vdwg.mxu0
  %v140 = vld [vmem:[%s2] sm:$0xf]
  %v141 = vld [vmem:[%s2 + $0x4] sm:$0xf]
  %v142 = vld [vmem:[%s2 + $0x8] sm:$0xf]
  %v143 = vld [vmem:[%s2 + $0xc] sm:$0xf]
  %v144 = vld [vmem:[%s2 + $0x10] sm:$0xf]
  %v145 = vld [vmem:[%s2 + $0x14] sm:$0xf]
  %v146 = vld [vmem:[%s2 + $0x18] sm:$0xf]
  %v147 = vld [vmem:[%s2 + $0x1c] sm:$0xf]
  %v148 = vpack.c.bf16 %v113, %v110
  %v149 = vpack.c.bf16 %v121, %v118
  %v150 = vpack.c.bf16 %v129, %v126
  %v151 = vpack.c.bf16 %v137, %v134
  %v160 = vunpack.c.l.b16 %v140
  %v161 = vunpack.c.l.b16 %v141
  %v162 = vunpack.c.l.b16 %v142
  %v163 = vunpack.c.l.b16 %v143
  %v164 = vunpack.c.l.b16 %v144
  %v165 = vunpack.c.l.b16 %v145
  %v166 = vunpack.c.l.b16 %v146
  %v167 = vunpack.c.l.b16 %v147
  %v168 = vpack.c.b16 %v161, %v160
  %v169 = vpack.c.b16 %v163, %v162
  %v170 = vpack.c.b16 %v165, %v164
  %v171 = vpack.c.b16 %v167, %v166
  %v173 = vsel %vm62, %v168, 0
  %v176 = vsel %vm62, %v169, 0
  %v179 = vsel %vm62, %v170, 0
  %v182 = vsel %vm62, %v171, 0
  %184 = vmatprep.subr.bf16.mxu0 0
  %185 = vmatpush1.bf16.msra.mxu0 0
  %186 = vmatprep.subr.bf16.mxu0 0
  %187 = vmatpush1.bf16.msra.mxu0 0
  %188 = vmatprep.subr.bf16.mxu0 0
  %189 = vmatpush1.bf16.msra.mxu0 0
  %190 = vmatprep.subr.bf16.mxu0 0
  %191 = vmatpush1.bf16.msra.mxu0 0
  %192 = vmatprep.subr.bf16.mxu0 0
  %193 = vmatpush1.bf16.msra.mxu0 %v151
  %194 = vmatprep.subr.bf16.mxu0 0
  %195 = vmatpush1.bf16.msra.mxu0 %v150
  %196 = vmatprep.subr.bf16.mxu0 0
  %197 = vmatpush1.bf16.msra.mxu0 %v149
  %198 = vmatprep.subr.bf16.mxu0 0
  %199 = vmatpush1.bf16.msra.mxu0 %v148
  %200 = vmatprep.subr.bf16.mxu0 0
  %201 = vmatpush2.bf16.msra.mxu0 0
  %202 = vmatprep.subr.bf16.mxu0 0
  %203 = vmatpush2.bf16.msra.mxu0 0
  %204 = vmatprep.subr.bf16.mxu0 0
  %205 = vmatpush2.bf16.msra.mxu0 0
  %206 = vmatprep.subr.bf16.mxu0 0
  %207 = vmatpush2.bf16.msra.mxu0 0
  %208 = vmatprep.subr.bf16.mxu0 0
  %209 = vmatpush2.bf16.msra.mxu0 0
  %210 = vmatprep.subr.bf16.mxu0 0
  %211 = vmatpush2.bf16.msra.mxu0 0
  %212 = vmatprep.subr.bf16.mxu0 0
  %213 = vmatpush2.bf16.msra.mxu0 0
  %214 = vmatprep.subr.bf16.mxu0 0
  %215 = vmatpush2.bf16.msra.mxu0 0
  %216 = vmatprep.mubr.bf16.mxu0 0
  %217 = vmatmul.mubr.bf16.gmra.mxu0 %v173
  %v218 = vpop.f32.mrf.mxu0
  %v219 = vadd.f32 0.0, %v218
  %v220 = vpop.f32.mrf.mxu0
  %v221 = vpop.f32.mrf.mxu0
  %v222 = vadd.f32 0.0, %v221
  %v223 = vpop.f32.mrf.mxu0
  %224 = vmatprep.mubr.bf16.mxu0 0
  %225 = vmatmul.mubr.bf16.gmra.mxu0 %v176
  %v226 = vpop.f32.mrf.mxu0
  %v227 = vadd.f32 0.0, %v226
  %v228 = vpop.f32.mrf.mxu0
  %v229 = vpop.f32.mrf.mxu0
  %v230 = vadd.f32 0.0, %v229
  %v231 = vpop.f32.mrf.mxu0
  %232 = vmatprep.mubr.bf16.mxu0 0
  %233 = vmatmul.mubr.bf16.gmra.mxu0 %v179
  %v234 = vpop.f32.mrf.mxu0
  %v235 = vadd.f32 0.0, %v234
  %v236 = vpop.f32.mrf.mxu0
  %v237 = vpop.f32.mrf.mxu0
  %v238 = vadd.f32 0.0, %v237
  %v239 = vpop.f32.mrf.mxu0
  %240 = vmatprep.mubr.bf16.mxu0 0
  %241 = vmatmul.mubr.bf16.gmra.mxu0 %v182
  %v242 = vpop.f32.mrf.mxu0
  %v243 = vadd.f32 0.0, %v242
  %v244 = vpop.f32.mrf.mxu0
  %v245 = vpop.f32.mrf.mxu0
  %v246 = vadd.f32 0.0, %v245
  %v247 = vpop.f32.mrf.mxu0
  %248 = vdwg.mxu0
  %v249 = vld [vmem:[%s3] sm:$0xff]
  %v250 = vld [vmem:[%s3 + $0x8] sm:$0xff]
  %v251 = vld [vmem:[%s3 + $0x10] sm:$0xff]
  %v252 = vld [vmem:[%s3 + $0x18] sm:$0xff]
  %v253 = vld [vmem:[%s3 + $0x20] sm:$0xff]
  %v254 = vld [vmem:[%s3 + $0x28] sm:$0xff]
  %v255 = vld [vmem:[%s3 + $0x30] sm:$0xff]
  %v256 = vld [vmem:[%s3 + $0x38] sm:$0xff]
  %265 = vrot.lane.b32.xlu0 %v249, 32
  %v266 = vpop.permute.xlu0 %265
  %267 = vrot.lane.b32.xlu0 %v250, 32
  %v268 = vpop.permute.xlu0 %267
  %269 = vrot.lane.b32.xlu0 %v251, 32
  %v270 = vpop.permute.xlu0 %269
  %271 = vrot.lane.b32.xlu0 %v252, 32
  %v272 = vpop.permute.xlu0 %271
  %273 = vrot.lane.b32.xlu0 %v253, 32
  %v274 = vpop.permute.xlu0 %273
  %275 = vrot.lane.b32.xlu0 %v254, 32
  %v276 = vpop.permute.xlu0 %275
  %277 = vrot.lane.b32.xlu0 %v255, 32
  %v278 = vpop.permute.xlu0 %277
  %279 = vrot.lane.b32.xlu0 %v256, 32
  %v280 = vpop.permute.xlu0 %279
  %vm289 = vcmask 261120
  %v290 = vsel %vm289, %v249, %v266
  %v291 = vsel %vm289, %v250, %v268
  %v292 = vsel %vm289, %v251, %v270
  %v293 = vsel %vm289, %v252, %v272
  %v294 = vsel %vm289, %v253, %v274
  %v295 = vsel %vm289, %v254, %v276
  %v296 = vsel %vm289, %v255, %v278
  %v297 = vsel %vm289, %v256, %v280
  %s298 = scalar_lea.vmem %s3, 64
  %v299 = vld [vmem:[%s298] sm:$0xff]
  %v300 = vld [vmem:[%s298 + $0x8] sm:$0xff]
  %v301 = vld [vmem:[%s298 + $0x10] sm:$0xff]
  %v302 = vld [vmem:[%s298 + $0x18] sm:$0xff]
  %v303 = vld [vmem:[%s298 + $0x20] sm:$0xff]
  %v304 = vld [vmem:[%s298 + $0x28] sm:$0xff]
  %v305 = vld [vmem:[%s298 + $0x30] sm:$0xff]
  %v306 = vld [vmem:[%s298 + $0x38] sm:$0xff]
  %315 = vrot.lane.b32.xlu0 %v299, 32
  %v316 = vpop.permute.xlu0 %315
  %317 = vrot.lane.b32.xlu0 %v300, 32
  %v318 = vpop.permute.xlu0 %317
  %319 = vrot.lane.b32.xlu0 %v301, 32
  %v320 = vpop.permute.xlu0 %319
  %321 = vrot.lane.b32.xlu0 %v302, 32
  %v322 = vpop.permute.xlu0 %321
  %323 = vrot.lane.b32.xlu0 %v303, 32
  %v324 = vpop.permute.xlu0 %323
  %325 = vrot.lane.b32.xlu0 %v304, 32
  %v326 = vpop.permute.xlu0 %325
  %327 = vrot.lane.b32.xlu0 %v305, 32
  %v328 = vpop.permute.xlu0 %327
  %329 = vrot.lane.b32.xlu0 %v306, 32
  %v330 = vpop.permute.xlu0 %329
  %v339 = vsel %vm289, %v299, %v316
  %v340 = vsel %vm289, %v300, %v318
  %v341 = vsel %vm289, %v301, %v320
  %v342 = vsel %vm289, %v302, %v322
  %v343 = vsel %vm289, %v303, %v324
  %v344 = vsel %vm289, %v304, %v326
  %v345 = vsel %vm289, %v305, %v328
  %v346 = vsel %vm289, %v306, %v330
  %v347 = vmul.f32 %v219, %v290
  %v348 = vmul.f32 %v222, %v291
  %v349 = vmul.f32 %v227, %v292
  %v350 = vmul.f32 %v230, %v293
  %v351 = vmul.f32 %v235, %v294
  %v352 = vmul.f32 %v238, %v295
  %v353 = vmul.f32 %v243, %v296
  %v354 = vmul.f32 %v246, %v297
  %v355 = vadd.f32 %v347, %v339
  %v356 = vadd.f32 %v348, %v340
  %v357 = vadd.f32 %v349, %v341
  %v358 = vadd.f32 %v350, %v342
  %v359 = vadd.f32 %v351, %v343
  %v360 = vadd.f32 %v352, %v344
  %v361 = vadd.f32 %v353, %v345
  %v362 = vadd.f32 %v354, %v346
  %v363 = vmax.f32 %v355, 0.0
  %v364 = vmax.f32 %v356, 0.0
  %v365 = vmax.f32 %v357, 0.0
  %v366 = vmax.f32 %v358, 0.0
  %v367 = vmax.f32 %v359, 0.0
  %v368 = vmax.f32 %v360, 0.0
  %v369 = vmax.f32 %v361, 0.0
  %v370 = vmax.f32 %v362, 0.0
  %v371 = vpack.c.bf16 %v364, %v363
  %v372 = vpack.c.bf16 %v366, %v365
  %v373 = vpack.c.bf16 %v368, %v367
  %v374 = vpack.c.bf16 %v370, %v369
  %s375 = scalar_lea.vmem %s1, 32
  %v376 = vld [vmem:[%s375] sm:$0xf]
  %v377 = vld [vmem:[%s375 + $0x4] sm:$0xf]
  %v378 = vld [vmem:[%s375 + $0x8] sm:$0xf]
  %v379 = vld [vmem:[%s375 + $0xc] sm:$0xf]
  %v380 = vld [vmem:[%s375 + $0x10] sm:$0xf]
  %v381 = vld [vmem:[%s375 + $0x14] sm:$0xf]
  %v382 = vld [vmem:[%s375 + $0x18] sm:$0xf]
  %v383 = vld [vmem:[%s375 + $0x1c] sm:$0xf]
  %v392 = vunpack.c.l.b16 %v376
  %v393 = vunpack.c.l.b16 %v377
  %v394 = vunpack.c.l.b16 %v378
  %v395 = vunpack.c.l.b16 %v379
  %v396 = vunpack.c.l.b16 %v380
  %v397 = vunpack.c.l.b16 %v381
  %v398 = vunpack.c.l.b16 %v382
  %v399 = vunpack.c.l.b16 %v383
  %v400 = vpack.c.b16 %v393, %v392
  %v401 = vpack.c.b16 %v395, %v394
  %v402 = vpack.c.b16 %v397, %v396
  %v403 = vpack.c.b16 %v399, %v398
  %v409 = vsel %vm62, %v371, 0
  %v412 = vsel %vm62, %v372, 0
  %v415 = vsel %vm62, %v373, 0
  %v418 = vsel %vm62, %v374, 0
  %420 = vmatprep.subr.bf16.mxu0 0
  %421 = vmatpush1.bf16.msra.mxu0 0
  %422 = vmatprep.subr.bf16.mxu0 0
  %423 = vmatpush1.bf16.msra.mxu0 0
  %424 = vmatprep.subr.bf16.mxu0 0
  %425 = vmatpush1.bf16.msra.mxu0 0
  %426 = vmatprep.subr.bf16.mxu0 0
  %427 = vmatpush1.bf16.msra.mxu0 0
  %428 = vmatprep.subr.bf16.mxu0 0
  %429 = vmatpush1.bf16.msra.mxu0 %v403
  %430 = vmatprep.subr.bf16.mxu0 0
  %431 = vmatpush1.bf16.msra.mxu0 %v402
  %432 = vmatprep.subr.bf16.mxu0 0
  %433 = vmatpush1.bf16.msra.mxu0 %v401
  %434 = vmatprep.subr.bf16.mxu0 0
  %435 = vmatpush1.bf16.msra.mxu0 %v400
  %436 = vmatprep.subr.bf16.mxu0 0
  %437 = vmatpush2.bf16.msra.mxu0 0
  %438 = vmatprep.subr.bf16.mxu0 0
  %439 = vmatpush2.bf16.msra.mxu0 0
  %440 = vmatprep.subr.bf16.mxu0 0
  %441 = vmatpush2.bf16.msra.mxu0 0
  %442 = vmatprep.subr.bf16.mxu0 0
  %443 = vmatpush2.bf16.msra.mxu0 0
  %444 = vmatprep.subr.bf16.mxu0 0
  %445 = vmatpush2.bf16.msra.mxu0 0
  %446 = vmatprep.subr.bf16.mxu0 0
  %447 = vmatpush2.bf16.msra.mxu0 0
  %448 = vmatprep.subr.bf16.mxu0 0
  %449 = vmatpush2.bf16.msra.mxu0 0
  %450 = vmatprep.subr.bf16.mxu0 0
  %451 = vmatpush2.bf16.msra.mxu0 0
  %452 = vmatprep.mubr.bf16.mxu0 0
  %453 = vmatmul.mubr.bf16.gmra.mxu0 %v409
  %v454 = vpop.f32.mrf.mxu0
  %v455 = vadd.f32 0.0, %v454
  %v456 = vpop.f32.mrf.mxu0
  %v457 = vpop.f32.mrf.mxu0
  %v458 = vadd.f32 0.0, %v457
  %v459 = vpop.f32.mrf.mxu0
  %460 = vmatprep.mubr.bf16.mxu0 0
  %461 = vmatmul.mubr.bf16.gmra.mxu0 %v412
  %v462 = vpop.f32.mrf.mxu0
  %v463 = vadd.f32 0.0, %v462
  %v464 = vpop.f32.mrf.mxu0
  %v465 = vpop.f32.mrf.mxu0
  %v466 = vadd.f32 0.0, %v465
  %v467 = vpop.f32.mrf.mxu0
  %468 = vmatprep.mubr.bf16.mxu0 0
  %469 = vmatmul.mubr.bf16.gmra.mxu0 %v415
  %v470 = vpop.f32.mrf.mxu0
  %v471 = vadd.f32 0.0, %v470
  %v472 = vpop.f32.mrf.mxu0
  %v473 = vpop.f32.mrf.mxu0
  %v474 = vadd.f32 0.0, %v473
  %v475 = vpop.f32.mrf.mxu0
  %476 = vmatprep.mubr.bf16.mxu0 0
  %477 = vmatmul.mubr.bf16.gmra.mxu0 %v418
  %v478 = vpop.f32.mrf.mxu0
  %v479 = vadd.f32 0.0, %v478
  %v480 = vpop.f32.mrf.mxu0
  %v481 = vpop.f32.mrf.mxu0
  %v482 = vadd.f32 0.0, %v481
  %v483 = vpop.f32.mrf.mxu0
  %484 = vdwg.mxu0
  %s485 = scalar_lea.vmem %s2, 32
  %v486 = vld [vmem:[%s485] sm:$0xf]
  %v487 = vld [vmem:[%s485 + $0x4] sm:$0xf]
  %v488 = vld [vmem:[%s485 + $0x8] sm:$0xf]
  %v489 = vld [vmem:[%s485 + $0xc] sm:$0xf]
  %v490 = vld [vmem:[%s485 + $0x10] sm:$0xf]
  %v491 = vld [vmem:[%s485 + $0x14] sm:$0xf]
  %v492 = vld [vmem:[%s485 + $0x18] sm:$0xf]
  %v493 = vld [vmem:[%s485 + $0x1c] sm:$0xf]
  %v494 = vpack.c.bf16 %v458, %v455
  %v495 = vpack.c.bf16 %v466, %v463
  %v496 = vpack.c.bf16 %v474, %v471
  %v497 = vpack.c.bf16 %v482, %v479
  %v506 = vunpack.c.l.b16 %v486
  %v507 = vunpack.c.l.b16 %v487
  %v508 = vunpack.c.l.b16 %v488
  %v509 = vunpack.c.l.b16 %v489
  %v510 = vunpack.c.l.b16 %v490
  %v511 = vunpack.c.l.b16 %v491
  %v512 = vunpack.c.l.b16 %v492
  %v513 = vunpack.c.l.b16 %v493
  %v514 = vpack.c.b16 %v507, %v506
  %v515 = vpack.c.b16 %v509, %v508
  %v516 = vpack.c.b16 %v511, %v510
  %v517 = vpack.c.b16 %v513, %v512
  %v519 = vsel %vm62, %v514, 0
  %v522 = vsel %vm62, %v515, 0
  %v525 = vsel %vm62, %v516, 0
  %v528 = vsel %vm62, %v517, 0
  %530 = vmatprep.subr.bf16.mxu0 0
  %531 = vmatpush1.bf16.msra.mxu0 0
  %532 = vmatprep.subr.bf16.mxu0 0
  %533 = vmatpush1.bf16.msra.mxu0 0
  %534 = vmatprep.subr.bf16.mxu0 0
  %535 = vmatpush1.bf16.msra.mxu0 0
  %536 = vmatprep.subr.bf16.mxu0 0
  %537 = vmatpush1.bf16.msra.mxu0 0
  %538 = vmatprep.subr.bf16.mxu0 0
  %539 = vmatpush1.bf16.msra.mxu0 %v497
  %540 = vmatprep.subr.bf16.mxu0 0
  %541 = vmatpush1.bf16.msra.mxu0 %v496
  %542 = vmatprep.subr.bf16.mxu0 0
  %543 = vmatpush1.bf16.msra.mxu0 %v495
  %544 = vmatprep.subr.bf16.mxu0 0
  %545 = vmatpush1.bf16.msra.mxu0 %v494
  %546 = vmatprep.subr.bf16.mxu0 0
  %547 = vmatpush2.bf16.msra.mxu0 0
  %548 = vmatprep.subr.bf16.mxu0 0
  %549 = vmatpush2.bf16.msra.mxu0 0
  %550 = vmatprep.subr.bf16.mxu0 0
  %551 = vmatpush2.bf16.msra.mxu0 0
  %552 = vmatprep.subr.bf16.mxu0 0
  %553 = vmatpush2.bf16.msra.mxu0 0
  %554 = vmatprep.subr.bf16.mxu0 0
  %555 = vmatpush2.bf16.msra.mxu0 0
  %556 = vmatprep.subr.bf16.mxu0 0
  %557 = vmatpush2.bf16.msra.mxu0 0
  %558 = vmatprep.subr.bf16.mxu0 0
  %559 = vmatpush2.bf16.msra.mxu0 0
  %560 = vmatprep.subr.bf16.mxu0 0
  %561 = vmatpush2.bf16.msra.mxu0 0
  %562 = vmatprep.mubr.bf16.mxu0 0
  %563 = vmatmul.mubr.bf16.gmra.mxu0 %v519
  %v564 = vpop.f32.mrf.mxu0
  %v565 = vadd.f32 0.0, %v564
  %v566 = vpop.f32.mrf.mxu0
  %v567 = vpop.f32.mrf.mxu0
  %v568 = vadd.f32 0.0, %v567
  %v569 = vpop.f32.mrf.mxu0
  %570 = vmatprep.mubr.bf16.mxu0 0
  %571 = vmatmul.mubr.bf16.gmra.mxu0 %v522
  %v572 = vpop.f32.mrf.mxu0
  %v573 = vadd.f32 0.0, %v572
  %v574 = vpop.f32.mrf.mxu0
  %v575 = vpop.f32.mrf.mxu0
  %v576 = vadd.f32 0.0, %v575
  %v577 = vpop.f32.mrf.mxu0
  %578 = vmatprep.mubr.bf16.mxu0 0
  %579 = vmatmul.mubr.bf16.gmra.mxu0 %v525
  %v580 = vpop.f32.mrf.mxu0
  %v581 = vadd.f32 0.0, %v580
  %v582 = vpop.f32.mrf.mxu0
  %v583 = vpop.f32.mrf.mxu0
  %v584 = vadd.f32 0.0, %v583
  %v585 = vpop.f32.mrf.mxu0
  %586 = vmatprep.mubr.bf16.mxu0 0
  %587 = vmatmul.mubr.bf16.gmra.mxu0 %v528
  %v588 = vpop.f32.mrf.mxu0
  %v589 = vadd.f32 0.0, %v588
  %v590 = vpop.f32.mrf.mxu0
  %v591 = vpop.f32.mrf.mxu0
  %v592 = vadd.f32 0.0, %v591
  %v593 = vpop.f32.mrf.mxu0
  %594 = vdwg.mxu0
  %s595 = scalar_lea.vmem %s3, 128
  %v596 = vld [vmem:[%s595] sm:$0xff]
  %v597 = vld [vmem:[%s595 + $0x8] sm:$0xff]
  %v598 = vld [vmem:[%s595 + $0x10] sm:$0xff]
  %v599 = vld [vmem:[%s595 + $0x18] sm:$0xff]
  %v600 = vld [vmem:[%s595 + $0x20] sm:$0xff]
  %v601 = vld [vmem:[%s595 + $0x28] sm:$0xff]
  %v602 = vld [vmem:[%s595 + $0x30] sm:$0xff]
  %v603 = vld [vmem:[%s595 + $0x38] sm:$0xff]
  %612 = vrot.lane.b32.xlu0 %v596, 32
  %v613 = vpop.permute.xlu0 %612
  %614 = vrot.lane.b32.xlu0 %v597, 32
  %v615 = vpop.permute.xlu0 %614
  %616 = vrot.lane.b32.xlu0 %v598, 32
  %v617 = vpop.permute.xlu0 %616
  %618 = vrot.lane.b32.xlu0 %v599, 32
  %v619 = vpop.permute.xlu0 %618
  %620 = vrot.lane.b32.xlu0 %v600, 32
  %v621 = vpop.permute.xlu0 %620
  %622 = vrot.lane.b32.xlu0 %v601, 32
  %v623 = vpop.permute.xlu0 %622
  %624 = vrot.lane.b32.xlu0 %v602, 32
  %v625 = vpop.permute.xlu0 %624
  %626 = vrot.lane.b32.xlu0 %v603, 32
  %v627 = vpop.permute.xlu0 %626
  %v636 = vsel %vm289, %v596, %v613
  %v637 = vsel %vm289, %v597, %v615
  %v638 = vsel %vm289, %v598, %v617
  %v639 = vsel %vm289, %v599, %v619
  %v640 = vsel %vm289, %v600, %v621
  %v641 = vsel %vm289, %v601, %v623
  %v642 = vsel %vm289, %v602, %v625
  %v643 = vsel %vm289, %v603, %v627
  %s644 = scalar_lea.vmem %s3, 192
  %v645 = vld [vmem:[%s644] sm:$0xff]
  %v646 = vld [vmem:[%s644 + $0x8] sm:$0xff]
  %v647 = vld [vmem:[%s644 + $0x10] sm:$0xff]
  %v648 = vld [vmem:[%s644 + $0x18] sm:$0xff]
  %v649 = vld [vmem:[%s644 + $0x20] sm:$0xff]
  %v650 = vld [vmem:[%s644 + $0x28] sm:$0xff]
  %v651 = vld [vmem:[%s644 + $0x30] sm:$0xff]
  %v652 = vld [vmem:[%s644 + $0x38] sm:$0xff]
  %661 = vrot.lane.b32.xlu0 %v645, 32
  %v662 = vpop.permute.xlu0 %661
  %663 = vrot.lane.b32.xlu0 %v646, 32
  %v664 = vpop.permute.xlu0 %663
  %665 = vrot.lane.b32.xlu0 %v647, 32
  %v666 = vpop.permute.xlu0 %665
  %667 = vrot.lane.b32.xlu0 %v648, 32
  %v668 = vpop.permute.xlu0 %667
  %669 = vrot.lane.b32.xlu0 %v649, 32
  %v670 = vpop.permute.xlu0 %669
  %671 = vrot.lane.b32.xlu0 %v650, 32
  %v672 = vpop.permute.xlu0 %671
  %673 = vrot.lane.b32.xlu0 %v651, 32
  %v674 = vpop.permute.xlu0 %673
  %675 = vrot.lane.b32.xlu0 %v652, 32
  %v676 = vpop.permute.xlu0 %675
  %v685 = vsel %vm289, %v645, %v662
  %v686 = vsel %vm289, %v646, %v664
  %v687 = vsel %vm289, %v647, %v666
  %v688 = vsel %vm289, %v648, %v668
  %v689 = vsel %vm289, %v649, %v670
  %v690 = vsel %vm289, %v650, %v672
  %v691 = vsel %vm289, %v651, %v674
  %v692 = vsel %vm289, %v652, %v676
  %v693 = vmul.f32 %v565, %v636
  %v694 = vmul.f32 %v568, %v637
  %v695 = vmul.f32 %v573, %v638
  %v696 = vmul.f32 %v576, %v639
  %v697 = vmul.f32 %v581, %v640
  %v698 = vmul.f32 %v584, %v641
  %v699 = vmul.f32 %v589, %v642
  %v700 = vmul.f32 %v592, %v643
  %v701 = vadd.f32 %v693, %v685
  %v702 = vadd.f32 %v694, %v686
  %v703 = vadd.f32 %v695, %v687
  %v704 = vadd.f32 %v696, %v688
  %v705 = vadd.f32 %v697, %v689
  %v706 = vadd.f32 %v698, %v690
  %v707 = vadd.f32 %v699, %v691
  %v708 = vadd.f32 %v700, %v692
  %v709 = vmax.f32 %v701, 0.0
  %v710 = vmax.f32 %v702, 0.0
  %v711 = vmax.f32 %v703, 0.0
  %v712 = vmax.f32 %v704, 0.0
  %v713 = vmax.f32 %v705, 0.0
  %v714 = vmax.f32 %v706, 0.0
  %v715 = vmax.f32 %v707, 0.0
  %v716 = vmax.f32 %v708, 0.0
  %v717 = vadd.f32 %v709, %v18
  %v718 = vadd.f32 %v710, %v19
  %v719 = vadd.f32 %v711, %v20
  %v720 = vadd.f32 %v712, %v21
  %v721 = vadd.f32 %v713, %v22
  %v722 = vadd.f32 %v714, %v23
  %v723 = vadd.f32 %v715, %v24
  %v724 = vadd.f32 %v716, %v25
  %725 = vst.msk [vmem:[%s4] sm:$0xff] %vm62, %v717
  %726 = vst.msk [vmem:[%s4 + $0x8] sm:$0xff] %vm62, %v718
  %727 = vst.msk [vmem:[%s4 + $0x10] sm:$0xff] %vm62, %v719
  %728 = vst.msk [vmem:[%s4 + $0x18] sm:$0xff] %vm62, %v720
  %729 = vst.msk [vmem:[%s4 + $0x20] sm:$0xff] %vm62, %v721
  %730 = vst.msk [vmem:[%s4 + $0x28] sm:$0xff] %vm62, %v722
  %731 = vst.msk [vmem:[%s4 + $0x30] sm:$0xff] %vm62, %v723
  %732 = vst.msk [vmem:[%s4 + $0x38] sm:$0xff] %vm62, %v724
  // Predicated region
  $region18: #{gc_block_forward.1} parent=0 // pred_check
    _
  $region19: #{gc_block_forward.1} parent=0 // pred_check_branch
    %734 = sbr.rel (0) target = $region21
  $region20: #{gc_block_forward.1} parent=0 // pred_region
    _
  $region21: #{gc_block_forward.1} parent=0 // pred_fallthru
    _
  // Predicated region
  $region22: #{gc_block_forward.1} parent=0 // pred_check
    _
  $region23: #{gc_block_forward.1} parent=0 // pred_check_branch
    %736 = sbr.rel (0) target = $region25
  $region24: #{gc_block_forward.1} parent=0 // pred_region
    _
  $region25: #{gc_block_forward.1} parent=0 // pred_fallthru
    _

</llo_original>
